<compile_context>
chip_gen: v7x
topology: tpu7x:2x2x1
jax: 0.10.0
libtpu: 0.0.40
codegen_flags: <defaults>
</compile_context>

<pallas_src>
import functools

import jax
import jax.numpy as jnp
from jax.experimental import pallas as pl
from jax.experimental.pallas import tpu as pltpu


def _round_up(x, m):
    return ((x + m - 1) // m) * m


def _is_high_bw_tpu():
    """v6e / v7x have enough HBM bandwidth to prefer lane-expanded indices."""
    try:
        kind = jax.devices()[0].device_kind.lower()
    except Exception:  # defensive: the compact layout is always safe
        return False
    return ("v6" in kind) or ("v7" in kind) or ("trillium" in kind)


def _interac_kernel(idx_ref, table_ref, o_ref, *, lane_w, expanded):
    """One batch tile.

    idx_ref   : (tbr, 2*pack) int32 combined indices      (compact layout), or
                (tbr, n_tot)  int32 lane-expanded indices  (expanded layout)
    table_ref : (n_tot, 2*lane_w) fused block-diag table [kron(I,W1) | kron(I,W2)]
    o_ref     : (tbr, lane_w) lane-dense packed output tile
    """
    tbr = o_ref.shape[0]
    n_tot = table_ref.shape[0]
    dt = table_ref.dtype

    iota = jax.lax.broadcasted_iota(jnp.int32, (tbr, n_tot), 1)
    idx = idx_ref[...]

    if expanded:
        # Single full-vreg compare; no pack loop, no lane extract/broadcast.
        mask = iota == idx
    else:
        # Boolean-OR accumulation: one compare + OR per packed sub-row and a
        # single cast at the end (instead of pack x (compare + cast + f32 add)).
        mask = iota == idx[:, 0:1]
        for j in range(1, idx.shape[1]):
            mask = mask | (iota == idx[:, j:j + 1])

    oh = mask.astype(dt)

    # Single fused MXU gather filling the 256-wide MXU on v6e/v7x.
    # lanes [0, lane_w) -> packed emb1 rows, [lane_w, 2*lane_w) -> emb2 rows.
    # Exact for fp32: every output element has exactly one nonzero product term.
    g = jnp.dot(oh, table_ref[...],
                preferred_element_type=jnp.float32,
                precision=jax.lax.Precision.HIGHEST)
    o_ref[...] = (g[:, :lane_w] * g[:, lane_w:]).astype(o_ref.dtype)


def interac_forward(x, emb1_w, emb2_w, *, max_tile_rows=8192, expand_idx=None):
    """x: (2, batch) int indices. emb*_w: (vocab, emb_size). -> (batch, emb_size)."""
    idx1 = jnp.asarray(x[0], dtype=jnp.int32)
    idx2 = jnp.asarray(x[1], dtype=jnp.int32)
    batch = idx1.shape[0]
    v1, emb = emb1_w.shape
    v2, emb_b = emb2_w.shape
    assert emb == emb_b, "embedding sizes must match"
    out_dtype = emb1_w.dtype

    if expand_idx is None:
        expand_idx = _is_high_bw_tpu()

    # ---- lane packing: pack consecutive batch rows into one 128-lane row ----
    if emb >= 128:
        emb_pad = _round_up(emb, 128)
        pack = 1
    else:
        emb_pad = 1 << max(emb - 1, 0).bit_length()   # next pow2 -> divides 128
        pack = 128 // emb_pad
    lane_w = pack * emb_pad                            # 128 whenever emb <= 128
    n1, n2 = pack * v1, pack * v2
    n_tot = n1 + n2

    # Zero-pad embedding columns so the packed layout stays 128-lane dense.
    if emb_pad != emb:
        w1 = jnp.pad(emb1_w, ((0, 0), (0, emb_pad - emb)))
        w2 = jnp.pad(emb2_w, ((0, 0), (0, emb_pad - emb)))
    else:
        w1, w2 = emb1_w, emb2_w

    # ---- batch tiling ----
    row_align = 8 * pack                       # keep sublane extents multiples of 8
    padded_min = _round_up(batch, row_align)
    tile_rows = min(max_tile_rows, padded_min)
    if padded_min > row_align:
        # Guarantee grid >= 2 so v7x's second TensorCore gets work.
        tile_rows = min(tile_rows, _round_up(padded_min // 2, row_align))
    tile_rows = max(row_align, _round_up(tile_rows, row_align))
    padded = _round_up(padded_min, tile_rows)
    grid = padded // tile_rows
    tbr = tile_rows // pack                    # packed rows per grid step
    rows = padded // pack                      # total packed rows

    # ---- combined gather indices (pad rows use index 0; sliced off later) ----
    idx1p = jnp.pad(idx1, (0, padded - batch))
    idx2p = jnp.pad(idx2, (0, padded - batch))
    off = jnp.arange(pack, dtype=jnp.int32)[None, :]
    cidx1 = idx1p.reshape(rows, pack) + off * v1          # column in [0, n1)
    cidx2 = idx2p.reshape(rows, pack) + off * v2 + n1     # column in [n1, n_tot)
    if expand_idx:
        # Lane-dense index slab: one full-vreg compare in the kernel.
        idx_in = jnp.concatenate([jnp.repeat(cidx1, v1, axis=1),
                                  jnp.repeat(cidx2, v2, axis=1)], axis=1)
    else:
        # Compact merged index block (single input, minimal HBM traffic).
        idx_in = jnp.concatenate([cidx1, cidx2], axis=1)
    idx_cols = idx_in.shape[1]

    # ---- fused block-diagonal table: [kron(I_pack, W1) | kron(I_pack, W2)] ----
    t1 = jnp.kron(jnp.eye(pack, dtype=out_dtype), w1.astype(out_dtype))  # (n1, lane_w)
    t2 = jnp.kron(jnp.eye(pack, dtype=out_dtype), w2.astype(out_dtype))  # (n2, lane_w)
    table = jnp.zeros((n_tot, 2 * lane_w), dtype=out_dtype)
    table = table.at[:n1, :lane_w].set(t1)
    table = table.at[n1:, lane_w:].set(t2)

    itemsize = jnp.dtype(out_dtype).itemsize
    cost = pl.CostEstimate(
        flops=2 * rows * n_tot * (2 * lane_w) + rows * lane_w,
        transcendentals=0,
        bytes_accessed=(idx_in.size * 4                    # index slab
                        + table.size * itemsize            # resident table
                        + rows * lane_w * itemsize),        # output
    )

    out_packed = pl.pallas_call(
        functools.partial(_interac_kernel, lane_w=lane_w, expanded=expand_idx),
        grid=(grid,),
        in_specs=[
            pl.BlockSpec((tbr, idx_cols), lambda i: (i, 0)),       # merged index tile
            pl.BlockSpec((n_tot, 2 * lane_w), lambda i: (0, 0)),   # resident fused table
        ],
        out_specs=pl.BlockSpec((tbr, lane_w), lambda i: (i, 0)),
        out_shape=jax.ShapeDtypeStruct((rows, lane_w), out_dtype),
        compiler_params=pltpu.CompilerParams(
            dimension_semantics=("parallel",)),  # independent tiles -> 2 TCs on v7x
        cost_estimate=cost,
    )(idx_in, table)

    # Free row-major relabel back to per-row layout; drop batch / emb padding.
    return out_packed.reshape(padded, emb_pad)[:batch, :emb]


if __name__ == "__main__":
    # conf = {'emb_size': 32, 'first': 16, 'second': 24}
    emb_size, first_size, second_size = 32, 16, 24

    key = jax.random.PRNGKey(0)
    k1, k2, k3, k4, k5, k6 = jax.random.split(key, 6)

    # nn.Embedding default init is N(0, 1) — replicate deterministically.
    emb1_w = jax.random.normal(k1, (first_size, emb_size), dtype=jnp.float32)
    emb2_w = jax.random.normal(k2, (second_size, emb_size), dtype=jnp.float32)

    # Case 1: small batch, auto-selected index layout (compact on v5e, expanded on v6e/v7x).
    batch = 8
    idx1 = jax.random.randint(k3, (batch,), 0, first_size, dtype=jnp.int32)
    idx2 = jax.random.randint(k4, (batch,), 0, second_size, dtype=jnp.int32)
    x = jnp.stack([idx1, idx2], axis=0)
    y = jax.block_until_ready(interac_forward(x, emb1_w, emb2_w))
    y_ref = emb1_w[idx1] * emb2_w[idx2]
    assert y.shape == (batch, emb_size)
    assert jnp.allclose(y, y_ref, atol=1e-6, rtol=1e-6)

    # Case 2: padding + multi-step grid (grid >= 2); exercise BOTH index layouts
    # explicitly so each kernel variant is validated regardless of chip.
    batch2 = 100
    idx1b = jax.random.randint(k5, (batch2,), 0, first_size, dtype=jnp.int32)
    idx2b = jax.random.randint(k6, (batch2,), 0, second_size, dtype=jnp.int32)
    xb = jnp.stack([idx1b, idx2b], axis=0)
    yb_ref = emb1_w[idx1b] * emb2_w[idx2b]
    for expand in (False, True):
        yb = jax.block_until_ready(
            interac_forward(xb, emb1_w, emb2_w, max_tile_rows=64, expand_idx=expand))
        assert yb.shape == (batch2, emb_size)
        assert jnp.allclose(yb, yb_ref, atol=1e-6, rtol=1e-6)

    print("KERNEL_OK")
</pallas_src>

<mosaic_0001>
module attributes {stable_mosaic.version = 11 : i64} {
  func.func @_interac_kernel(%arg0: i32, %arg1: memref<8x8xi32, #tpu.memory_space<vmem>>, %arg2: memref<160x256xf32, #tpu.memory_space<vmem>>, %arg3: memref<8x128xf32, #tpu.memory_space<vmem>>) attributes {dimension_semantics = [#tpu.dimension_semantics<parallel>], iteration_bounds = array<i64: 1>, scalar_prefetch = 0 : i64, scratch_operands = 0 : i64, tpu.core_type = #tpu.core_type<tc>, window_params = [{transform_indices = @transform_0, window_bounds = array<i64: 8, 8>}, {pipeline_mode = #tpu.pipeline_mode<synchronous>, transform_indices = @transform_1, window_bounds = array<i64: 160, 256>}, {transform_indices = @transform_2, window_bounds = array<i64: 8, 128>}]} {
    %0 = tpu.iota {dimensions = array<i32: 1>} : vector<8x160xi32>
    %c0 = arith.constant 0 : index
    %c0_0 = arith.constant 0 : index
    %1 = vector.load %arg1[%c0, %c0_0] : memref<8x8xi32, #tpu.memory_space<vmem>>, vector<8x8xi32>
    %2 = vector.extract_strided_slice %1 {offsets = [0, 0], sizes = [8, 1], strides = [1, 1]} : vector<8x8xi32> to vector<8x1xi32>
    %3 = vector.broadcast %2 : vector<8x1xi32> to vector<8x160xi32>
    %4 = arith.cmpi eq, %0, %3 : vector<8x160xi32>
    %5 = vector.extract_strided_slice %1 {offsets = [0, 1], sizes = [8, 1], strides = [1, 1]} : vector<8x8xi32> to vector<8x1xi32>
    %6 = vector.broadcast %5 : vector<8x1xi32> to vector<8x160xi32>
    %7 = arith.cmpi eq, %0, %6 : vector<8x160xi32>
    %8 = arith.ori %4, %7 : vector<8x160xi1>
    %9 = vector.extract_strided_slice %1 {offsets = [0, 2], sizes = [8, 1], strides = [1, 1]} : vector<8x8xi32> to vector<8x1xi32>
    %10 = vector.broadcast %9 : vector<8x1xi32> to vector<8x160xi32>
    %11 = arith.cmpi eq, %0, %10 : vector<8x160xi32>
    %12 = arith.ori %8, %11 : vector<8x160xi1>
    %13 = vector.extract_strided_slice %1 {offsets = [0, 3], sizes = [8, 1], strides = [1, 1]} : vector<8x8xi32> to vector<8x1xi32>
    %14 = vector.broadcast %13 : vector<8x1xi32> to vector<8x160xi32>
    %15 = arith.cmpi eq, %0, %14 : vector<8x160xi32>
    %16 = arith.ori %12, %15 : vector<8x160xi1>
    %17 = vector.extract_strided_slice %1 {offsets = [0, 4], sizes = [8, 1], strides = [1, 1]} : vector<8x8xi32> to vector<8x1xi32>
    %18 = vector.broadcast %17 : vector<8x1xi32> to vector<8x160xi32>
    %19 = arith.cmpi eq, %0, %18 : vector<8x160xi32>
    %20 = arith.ori %16, %19 : vector<8x160xi1>
    %21 = vector.extract_strided_slice %1 {offsets = [0, 5], sizes = [8, 1], strides = [1, 1]} : vector<8x8xi32> to vector<8x1xi32>
    %22 = vector.broadcast %21 : vector<8x1xi32> to vector<8x160xi32>
    %23 = arith.cmpi eq, %0, %22 : vector<8x160xi32>
    %24 = arith.ori %20, %23 : vector<8x160xi1>
    %25 = vector.extract_strided_slice %1 {offsets = [0, 6], sizes = [8, 1], strides = [1, 1]} : vector<8x8xi32> to vector<8x1xi32>
    %26 = vector.broadcast %25 : vector<8x1xi32> to vector<8x160xi32>
    %27 = arith.cmpi eq, %0, %26 : vector<8x160xi32>
    %28 = arith.ori %24, %27 : vector<8x160xi1>
    %29 = vector.extract_strided_slice %1 {offsets = [0, 7], sizes = [8, 1], strides = [1, 1]} : vector<8x8xi32> to vector<8x1xi32>
    %30 = vector.broadcast %29 : vector<8x1xi32> to vector<8x160xi32>
    %31 = arith.cmpi eq, %0, %30 : vector<8x160xi32>
    %32 = arith.ori %28, %31 : vector<8x160xi1>
    %33 = arith.extui %32 : vector<8x160xi1> to vector<8x160xi32>
    %34 = arith.sitofp %33 : vector<8x160xi32> to vector<8x160xf32>
    %c0_1 = arith.constant 0 : index
    %c0_2 = arith.constant 0 : index
    %35 = vector.load %arg2[%c0_1, %c0_2] : memref<160x256xf32, #tpu.memory_space<vmem>>, vector<160x256xf32>
    %cst = arith.constant dense<0.000000e+00> : vector<8x256xf32>
    %36 = tpu.matmul %34, %35, %cst {dimension_numbers = #tpu.dot_dimension_numbers<[1], [0], [0], [1], [0, 0, 1, 1], [], []>, precision = #tpu.contract_precision<fp32>} : vector<8x160xf32>, vector<160x256xf32>, vector<8x256xf32> -> vector<8x256xf32>
    %37 = vector.extract_strided_slice %36 {offsets = [0, 0], sizes = [8, 128], strides = [1, 1]} : vector<8x256xf32> to vector<8x128xf32>
    %38 = vector.extract_strided_slice %36 {offsets = [0, 128], sizes = [8, 128], strides = [1, 1]} : vector<8x256xf32> to vector<8x128xf32>
    %39 = arith.mulf %37, %38 : vector<8x128xf32>
    %c0_3 = arith.constant 0 : index
    %c0_4 = arith.constant 0 : index
    %40 = vector.load %arg3[%c0_3, %c0_4] : memref<8x128xf32, #tpu.memory_space<vmem>>, vector<8x128xf32>
    tpu.vector_store %arg3[%c0_3, %c0_4], %39 {strides = array<i32>} : memref<8x128xf32, #tpu.memory_space<vmem>>, vector<8x128xf32>,
    return
  }
  func.func @transform_0(%arg0: i32) -> (i32, i32) {
    %c0_i32 = arith.constant 0 : i32
    %c0_i32_0 = arith.constant 0 : i32
    return %arg0, %c0_i32 : i32, i32
  }
  func.func @transform_1(%arg0: i32) -> (i32, i32) {
    %c0_i32 = arith.constant 0 : i32
    %c0_i32_0 = arith.constant 0 : i32
    %c0_i32_1 = arith.constant 0 : i32
    return %c0_i32, %c0_i32_0 : i32, i32
  }
  func.func @transform_2(%arg0: i32) -> (i32, i32) {
    %c0_i32 = arith.constant 0 : i32
    %c0_i32_0 = arith.constant 0 : i32
    return %arg0, %c0_i32 : i32, i32
  }
}

</mosaic_0001>

<llo_original>
// kernel: tpu_custom_call.1
$region0: #{tpu_custom_call.1}
  #allocation0 [shape = 'u32[]', space=smem, size = 0x4, offset = 0x4, fixed_abs, tag = 'smem constant byte address 0x4 - core index']
  #allocation1 [shape = 'u32[144,128]{1,0:T(1,128)}', space=vmem, size = 0x12000, scoped, tag = 'internal scratch']
  %s0 = inlined_call_operand.hbm [shape: s32[8,8], index: 0, kind: input, shape index: {}]
  %s1 = inlined_call_operand.hbm [shape: f32[160,256], index: 1, kind: input, shape index: {}]
  %s2 = inlined_call_operand.hbm [shape: f32[8,128], index: 2, kind: output, shape index: {}]
  %s3 = sld [smem:[#allocation0]]
  $region26: #{tpu_custom_call.1} parent=0
    _
  %s5 = ssub.s32 1, %s3
  %s6 = scalar_select 0, %s5, %s3
  $region1: #{tpu_custom_call.1} parent=0
    #allocation2 [shape = 'u8[4096]{0}', space=vmem, size = 0x1000, scoped, tag = 'input window, operand 0, single buffered']
    #allocation3 [shape = 's32[1]{0}', space=sflag, size = 0x4, scoped, tag = 'scoped memory for tpu_custom_call.1']
    #allocation4 [shape = 's32[1]{0}', space=sflag, size = 0x4, scoped, tag = 'scoped memory for tpu_custom_call.1']
    #allocation5 [shape = 'u8[163840]{0}', space=vmem, size = 0x28000, scoped, tag = 'input window, operand 1, single buffered']
    #allocation6 [shape = 's32[1]{0}', space=sflag, size = 0x4, scoped, tag = 'scoped memory for tpu_custom_call.1']
    #allocation7 [shape = 'u8[4096]{0}', space=vmem, size = 0x1000, scoped, tag = 'output window, operand 0, single buffered']
    %7 = vsyncpa [#allocation3], 0
    %8 = vsyncpa [#allocation6], 0
    %9 = vsyncpa [#allocation4], 0
    // Predicated region
    $region2: #{tpu_custom_call.1} parent=1 // pred_check
      _
    $region3: #{tpu_custom_call.1} parent=1 // pred_check_branch
      %11 = sbr.rel (0) target = $region5
    $region4: #{tpu_custom_call.1} parent=1 // pred_region
      %s13 = ssub.s32 128, 128
      %14 = vsyncadd [#allocation3], %s13
      %s16 = sshll.u32 [#allocation2], 4
      %s17 = int_to_ptr.vmem [resolvable:$true] %s16
      %19 = dma.hbm_to_vmem [thread:$0]  %s0, 128, %s17, [#allocation3]
    $region5: #{tpu_custom_call.1} parent=1 // pred_fallthru
      _
    // Predicated region
    $region6: #{tpu_custom_call.1} parent=1 // pred_check
      _
    $region7: #{tpu_custom_call.1} parent=1 // pred_check_branch
      %21 = sbr.rel (0) target = $region9
    $region8: #{tpu_custom_call.1} parent=1 // pred_region
      %s23 = ssub.s32 5120, 5120
      %24 = vsyncadd [#allocation6], %s23
      %s25 = sshll.u32 [#allocation5], 4
      %s26 = int_to_ptr.vmem [resolvable:$true] %s25
      %31 = dma.hbm_to_vmem [thread:$0]  %s1, 5120, %s26, [#allocation6], 256, 256, 16
    $region9: #{tpu_custom_call.1} parent=1 // pred_fallthru
      _
    // Predicated region
    $region10: #{tpu_custom_call.1} parent=1 // pred_check
      _
    $region11: #{tpu_custom_call.1} parent=1 // pred_check_branch
      %33 = sbr.rel (0) target = $region13
    $region12: #{tpu_custom_call.1} parent=1 // pred_region
      %34 = dma.done [#allocation3], 128
    $region13: #{tpu_custom_call.1} parent=1 // pred_fallthru
      _
    // Predicated region
    $region14: #{tpu_custom_call.1} parent=1 // pred_check
      _
    $region15: #{tpu_custom_call.1} parent=1 // pred_check_branch
      %36 = sbr.rel (0) target = $region17
    $region16: #{tpu_custom_call.1} parent=1 // pred_region
      %37 = dma.done [#allocation6], 5120
    $region17: #{tpu_custom_call.1} parent=1 // pred_fallthru
      _
    %v38 = vlaneseq
    %v39 = vand.u32 %v38, 127
    %v40 = vadd.s32 %v39, 128
    %v41 = vld [vmem:[#allocation2] sm:$0xff]
    %42 = vset.pattern.permute.xlu0 0
    %43 = vperm.xlu0 %42, %v41
    %v44 = vpop.permute.xlu0 %43
    %vm45 = vcmp.eq.s32.totalorder %v39, %v44
    %vm46 = vcmp.eq.s32.totalorder %v40, %v44
    %47 = vset.pattern.permute.xlu0 1
    %48 = vperm.xlu0 %47, %v41
    %v49 = vpop.permute.xlu0 %48
    %vm50 = vcmp.eq.s32.totalorder %v39, %v49
    %vm51 = vcmp.eq.s32.totalorder %v40, %v49
    %vm52 = vmor %vm45, %vm50
    %vm53 = vmor %vm46, %vm51
    %54 = vset.pattern.permute.xlu0 2
    %55 = vperm.xlu0 %54, %v41
    %v56 = vpop.permute.xlu0 %55
    %vm57 = vcmp.eq.s32.totalorder %v39, %v56
    %vm58 = vcmp.eq.s32.totalorder %v40, %v56
    %vm59 = vmor %vm52, %vm57
    %vm60 = vmor %vm53, %vm58
    %61 = vset.pattern.permute.xlu0 3
    %62 = vperm.xlu0 %61, %v41
    %v63 = vpop.permute.xlu0 %62
    %vm64 = vcmp.eq.s32.totalorder %v39, %v63
    %vm65 = vcmp.eq.s32.totalorder %v40, %v63
    %vm66 = vmor %vm59, %vm64
    %vm67 = vmor %vm60, %vm65
    %68 = vset.pattern.permute.xlu0 4
    %69 = vperm.xlu0 %68, %v41
    %v70 = vpop.permute.xlu0 %69
    %vm71 = vcmp.eq.s32.totalorder %v39, %v70
    %vm72 = vcmp.eq.s32.totalorder %v40, %v70
    %vm73 = vmor %vm66, %vm71
    %vm74 = vmor %vm67, %vm72
    %75 = vset.pattern.permute.xlu0 5
    %76 = vperm.xlu0 %75, %v41
    %v77 = vpop.permute.xlu0 %76
    %vm78 = vcmp.eq.s32.totalorder %v39, %v77
    %vm79 = vcmp.eq.s32.totalorder %v40, %v77
    %vm80 = vmor %vm73, %vm78
    %vm81 = vmor %vm74, %vm79
    %82 = vset.pattern.permute.xlu0 6
    %83 = vperm.xlu0 %82, %v41
    %v84 = vpop.permute.xlu0 %83
    %vm85 = vcmp.eq.s32.totalorder %v39, %v84
    %vm86 = vcmp.eq.s32.totalorder %v40, %v84
    %vm87 = vmor %vm80, %vm85
    %vm88 = vmor %vm81, %vm86
    %89 = vset.pattern.permute.xlu0 7
    %90 = vperm.xlu0 %89, %v41
    %v91 = vpop.permute.xlu0 %90
    %vm92 = vcmp.eq.s32.totalorder %v39, %v91
    %vm93 = vcmp.eq.s32.totalorder %v40, %v91
    %vm94 = vmor %vm87, %vm92
    %vm95 = vmor %vm88, %vm93
    %v96 = vsel %vm94, 1, 0
    %v97 = vsel %vm95, 1, 0
    %v98 = vcvt.s32.f32 %v96
    %v99 = vcvt.s32.f32 %v97
    %v100 = vld [vmem:[#allocation5] sm:$0xff]
    %v101 = vld [vmem:[#allocation5 + $0x8] sm:$0xff]
    %v102 = vld [vmem:[#allocation5 + $0x10] sm:$0xff]
    %v103 = vld [vmem:[#allocation5 + $0x18] sm:$0xff]
    %v104 = vld [vmem:[#allocation5 + $0x20] sm:$0xff]
    %v105 = vld [vmem:[#allocation5 + $0x28] sm:$0xff]
    %v106 = vld [vmem:[#allocation5 + $0x30] sm:$0xff]
    %v107 = vld [vmem:[#allocation5 + $0x38] sm:$0xff]
    %v108 = vld [vmem:[#allocation5 + $0x40] sm:$0xff]
    %v109 = vld [vmem:[#allocation5 + $0x48] sm:$0xff]
    %v110 = vld [vmem:[#allocation5 + $0x50] sm:$0xff]
    %v111 = vld [vmem:[#allocation5 + $0x58] sm:$0xff]
    %v112 = vld [vmem:[#allocation5 + $0x60] sm:$0xff]
    %v113 = vld [vmem:[#allocation5 + $0x68] sm:$0xff]
    %v114 = vld [vmem:[#allocation5 + $0x70] sm:$0xff]
    %v115 = vld [vmem:[#allocation5 + $0x78] sm:$0xff]
    %v116 = vld [vmem:[#allocation5 + $0x80] sm:$0xff]
    %v117 = vld [vmem:[#allocation5 + $0x88] sm:$0xff]
    %v118 = vld [vmem:[#allocation5 + $0x90] sm:$0xff]
    %v119 = vld [vmem:[#allocation5 + $0x98] sm:$0xff]
    %v120 = vld [vmem:[#allocation5 + $0xa0] sm:$0xff]
    %v121 = vld [vmem:[#allocation5 + $0xa8] sm:$0xff]
    %v122 = vld [vmem:[#allocation5 + $0xb0] sm:$0xff]
    %v123 = vld [vmem:[#allocation5 + $0xb8] sm:$0xff]
    %v124 = vld [vmem:[#allocation5 + $0xc0] sm:$0xff]
    %v125 = vld [vmem:[#allocation5 + $0xc8] sm:$0xff]
    %v126 = vld [vmem:[#allocation5 + $0xd0] sm:$0xff]
    %v127 = vld [vmem:[#allocation5 + $0xd8] sm:$0xff]
    %v128 = vld [vmem:[#allocation5 + $0xe0] sm:$0xff]
    %v129 = vld [vmem:[#allocation5 + $0xe8] sm:$0xff]
    %v130 = vld [vmem:[#allocation5 + $0xf0] sm:$0xff]
    %v131 = vld [vmem:[#allocation5 + $0xf8] sm:$0xff]
    %v132 = vld [vmem:[#allocation5 + $0x100] sm:$0xff]
    %v133 = vld [vmem:[#allocation5 + $0x108] sm:$0xff]
    %v134 = vld [vmem:[#allocation5 + $0x110] sm:$0xff]
    %v135 = vld [vmem:[#allocation5 + $0x118] sm:$0xff]
    %v136 = vld [vmem:[#allocation5 + $0x120] sm:$0xff]
    %v137 = vld [vmem:[#allocation5 + $0x128] sm:$0xff]
    %v138 = vld [vmem:[#allocation5 + $0x130] sm:$0xff]
    %v139 = vld [vmem:[#allocation5 + $0x138] sm:$0xff]
    %vm140 = vcmask 261120
    %v142 = vsel %vm140, %v99, 0
    %v144 = vand.u32 %v101, 4294901760
    %145 = vmatprep.subr.mxu0 %v144
    %v146 = vand.u32 %v100, 4294901760
    %147 = vmatpush1.msra.mxu0 %v146
    %v148 = vand.u32 %v103, 4294901760
    %149 = vmatprep.subr.mxu0 %v148
    %v150 = vand.u32 %v102, 4294901760
    %151 = vmatpush1.msra.mxu0 %v150
    %v152 = vand.u32 %v105, 4294901760
    %153 = vmatprep.subr.mxu0 %v152
    %v154 = vand.u32 %v104, 4294901760
    %155 = vmatpush1.msra.mxu0 %v154
    %v156 = vand.u32 %v107, 4294901760
    %157 = vmatprep.subr.mxu0 %v156
    %v158 = vand.u32 %v106, 4294901760
    %159 = vmatpush1.msra.mxu0 %v158
    %v160 = vand.u32 %v109, 4294901760
    %161 = vmatprep.subr.mxu0 %v160
    %v162 = vand.u32 %v108, 4294901760
    %163 = vmatpush1.msra.mxu0 %v162
    %v164 = vand.u32 %v111, 4294901760
    %165 = vmatprep.subr.mxu0 %v164
    %v166 = vand.u32 %v110, 4294901760
    %167 = vmatpush1.msra.mxu0 %v166
    %v168 = vand.u32 %v113, 4294901760
    %169 = vmatprep.subr.mxu0 %v168
    %v170 = vand.u32 %v112, 4294901760
    %171 = vmatpush1.msra.mxu0 %v170
    %v172 = vand.u32 %v115, 4294901760
    %173 = vmatprep.subr.mxu0 %v172
    %v174 = vand.u32 %v114, 4294901760
    %175 = vmatpush1.msra.mxu0 %v174
    %v176 = vand.u32 %v117, 4294901760
    %177 = vmatprep.subr.mxu0 %v176
    %v178 = vand.u32 %v116, 4294901760
    %179 = vmatpush1.msra.mxu0 %v178
    %v180 = vand.u32 %v119, 4294901760
    %181 = vmatprep.subr.mxu0 %v180
    %v182 = vand.u32 %v118, 4294901760
    %183 = vmatpush1.msra.mxu0 %v182
    %v184 = vand.u32 %v121, 4294901760
    %185 = vmatprep.subr.mxu0 %v184
    %v186 = vand.u32 %v120, 4294901760
    %187 = vmatpush1.msra.mxu0 %v186
    %v188 = vand.u32 %v123, 4294901760
    %189 = vmatprep.subr.mxu0 %v188
    %v190 = vand.u32 %v122, 4294901760
    %191 = vmatpush1.msra.mxu0 %v190
    %v192 = vand.u32 %v125, 4294901760
    %193 = vmatprep.subr.mxu0 %v192
    %v194 = vand.u32 %v124, 4294901760
    %195 = vmatpush1.msra.mxu0 %v194
    %v196 = vand.u32 %v127, 4294901760
    %197 = vmatprep.subr.mxu0 %v196
    %v198 = vand.u32 %v126, 4294901760
    %199 = vmatpush1.msra.mxu0 %v198
    %v200 = vand.u32 %v129, 4294901760
    %201 = vmatprep.subr.mxu0 %v200
    %v202 = vand.u32 %v128, 4294901760
    %203 = vmatpush1.msra.mxu0 %v202
    %v204 = vand.u32 %v131, 4294901760
    %205 = vmatprep.subr.mxu0 %v204
    %v206 = vand.u32 %v130, 4294901760
    %207 = vmatpush1.msra.mxu0 %v206
    %v208 = vand.u32 %v133, 4294901760
    %209 = vmatprep.subr.mxu0 %v208
    %v210 = vand.u32 %v132, 4294901760
    %211 = vmatpush1.msra.mxu0 %v210
    %v212 = vand.u32 %v135, 4294901760
    %213 = vmatprep.subr.mxu0 %v212
    %v214 = vand.u32 %v134, 4294901760
    %215 = vmatpush1.msra.mxu0 %v214
    %v216 = vand.u32 %v137, 4294901760
    %217 = vmatprep.subr.mxu0 %v216
    %v218 = vand.u32 %v136, 4294901760
    %219 = vmatpush1.msra.mxu0 %v218
    %v220 = vand.u32 %v139, 4294901760
    %221 = vmatprep.subr.mxu0 %v220
    %v222 = vand.u32 %v138, 4294901760
    %223 = vmatpush1.msra.mxu0 %v222
    %224 = vmatprep.subr.mxu0 0.0
    %225 = vmatpush1.msra.mxu0 0.0
    %226 = vmatprep.subr.mxu0 0.0
    %227 = vmatpush1.msra.mxu0 0.0
    %228 = vmatprep.subr.mxu0 0.0
    %229 = vmatpush1.msra.mxu0 0.0
    %230 = vmatprep.subr.mxu0 0.0
    %231 = vmatpush1.msra.mxu0 0.0
    %232 = vmatprep.subr.mxu0 0.0
    %233 = vmatpush1.msra.mxu0 0.0
    %234 = vmatprep.subr.mxu0 0.0
    %235 = vmatpush1.msra.mxu0 0.0
    %236 = vmatprep.subr.mxu0 0.0
    %237 = vmatpush1.msra.mxu0 0.0
    %238 = vmatprep.subr.mxu0 0.0
    %239 = vmatpush1.msra.mxu0 0.0
    %240 = vmatprep.subr.mxu0 0.0
    %241 = vmatpush1.msra.mxu0 0.0
    %242 = vmatprep.subr.mxu0 0.0
    %243 = vmatpush1.msra.mxu0 0.0
    %244 = vmatprep.subr.mxu0 0.0
    %245 = vmatpush1.msra.mxu0 0.0
    %246 = vmatprep.subr.mxu0 0.0
    %247 = vmatpush1.msra.mxu0 0.0
    %v248 = vand.u32 %v142, 4294901760
    %v249 = vsub.f32 %v142, %v248
    %v250 = vand.u32 %v249, 4294901760
    %v251 = vsub.f32 %v249, %v250
    %v252 = vand.u32 %v251, 4294901760
    %253 = vmatprep.mubr.f32.mxu0 %v252
    %v254 = vand.u32 %v98, 4294901760
    %v255 = vsub.f32 %v98, %v254
    %v256 = vand.u32 %v255, 4294901760
    %v257 = vsub.f32 %v255, %v256
    %v258 = vand.u32 %v257, 4294901760
    %259 = vmatmul.mubr.f32.gmra.mrb[0].mxu0 %v258
    %v260 = vpop.f32.mrb[0].mxu0
    %v261 = vadd.f32 0.0, %v260
    %v262 = vpop.f32.mrb[0].mxu0
    %v263 = vadd.f32 0.0, %v262
    %264 = vdwg.mxu0
    %v265 = vand.u32 %v101, 4294901760
    %v266 = vsub.f32 %v101, %v265
    %v267 = vand.u32 %v266, 4294901760
    %v268 = vsub.f32 %v266, %v267
    %v269 = vand.u32 %v268, 4294901760
    %270 = vmatprep.subr.mxu0 %v269
    %v271 = vand.u32 %v100, 4294901760
    %v272 = vsub.f32 %v100, %v271
    %v273 = vand.u32 %v272, 4294901760
    %v274 = vsub.f32 %v272, %v273
    %v275 = vand.u32 %v274, 4294901760
    %276 = vmatpush1.msra.mxu0 %v275
    %v277 = vand.u32 %v103, 4294901760
    %v278 = vsub.f32 %v103, %v277
    %v279 = vand.u32 %v278, 4294901760
    %v280 = vsub.f32 %v278, %v279
    %v281 = vand.u32 %v280, 4294901760
    %282 = vmatprep.subr.mxu0 %v281
    %v283 = vand.u32 %v102, 4294901760
    %v284 = vsub.f32 %v102, %v283
    %v285 = vand.u32 %v284, 4294901760
    %v286 = vsub.f32 %v284, %v285
    %v287 = vand.u32 %v286, 4294901760
    %288 = vmatpush1.msra.mxu0 %v287
    %v289 = vand.u32 %v105, 4294901760
    %v290 = vsub.f32 %v105, %v289
    %v291 = vand.u32 %v290, 4294901760
    %v292 = vsub.f32 %v290, %v291
    %v293 = vand.u32 %v292, 4294901760
    %294 = vmatprep.subr.mxu0 %v293
    %v295 = vand.u32 %v104, 4294901760
    %v296 = vsub.f32 %v104, %v295
    %v297 = vand.u32 %v296, 4294901760
    %v298 = vsub.f32 %v296, %v297
    %v299 = vand.u32 %v298, 4294901760
    %300 = vmatpush1.msra.mxu0 %v299
    %v301 = vand.u32 %v107, 4294901760
    %v302 = vsub.f32 %v107, %v301
    %v303 = vand.u32 %v302, 4294901760
    %v304 = vsub.f32 %v302, %v303
    %v305 = vand.u32 %v304, 4294901760
    %306 = vmatprep.subr.mxu0 %v305
    %v307 = vand.u32 %v106, 4294901760
    %v308 = vsub.f32 %v106, %v307
    %v309 = vand.u32 %v308, 4294901760
    %v310 = vsub.f32 %v308, %v309
    %v311 = vand.u32 %v310, 4294901760
    %312 = vmatpush1.msra.mxu0 %v311
    %v313 = vand.u32 %v109, 4294901760
    %v314 = vsub.f32 %v109, %v313
    %v315 = vand.u32 %v314, 4294901760
    %v316 = vsub.f32 %v314, %v315
    %v317 = vand.u32 %v316, 4294901760
    %318 = vmatprep.subr.mxu0 %v317
    %v319 = vand.u32 %v108, 4294901760
    %v320 = vsub.f32 %v108, %v319
    %v321 = vand.u32 %v320, 4294901760
    %v322 = vsub.f32 %v320, %v321
    %v323 = vand.u32 %v322, 4294901760
    %324 = vmatpush1.msra.mxu0 %v323
    %v325 = vand.u32 %v111, 4294901760
    %v326 = vsub.f32 %v111, %v325
    %v327 = vand.u32 %v326, 4294901760
    %v328 = vsub.f32 %v326, %v327
    %v329 = vand.u32 %v328, 4294901760
    %330 = vmatprep.subr.mxu0 %v329
    %v331 = vand.u32 %v110, 4294901760
    %v332 = vsub.f32 %v110, %v331
    %v333 = vand.u32 %v332, 4294901760
    %v334 = vsub.f32 %v332, %v333
    %v335 = vand.u32 %v334, 4294901760
    %336 = vmatpush1.msra.mxu0 %v335
    %v337 = vand.u32 %v113, 4294901760
    %v338 = vsub.f32 %v113, %v337
    %v339 = vand.u32 %v338, 4294901760
    %v340 = vsub.f32 %v338, %v339
    %v341 = vand.u32 %v340, 4294901760
    %342 = vmatprep.subr.mxu0 %v341
    %v343 = vand.u32 %v112, 4294901760
    %v344 = vsub.f32 %v112, %v343
    %v345 = vand.u32 %v344, 4294901760
    %v346 = vsub.f32 %v344, %v345
    %v347 = vand.u32 %v346, 4294901760
    %348 = vmatpush1.msra.mxu0 %v347
    %v349 = vand.u32 %v115, 4294901760
    %v350 = vsub.f32 %v115, %v349
    %v351 = vand.u32 %v350, 4294901760
    %v352 = vsub.f32 %v350, %v351
    %v353 = vand.u32 %v352, 4294901760
    %354 = vmatprep.subr.mxu0 %v353
    %v355 = vand.u32 %v114, 4294901760
    %v356 = vsub.f32 %v114, %v355
    %v357 = vand.u32 %v356, 4294901760
    %v358 = vsub.f32 %v356, %v357
    %v359 = vand.u32 %v358, 4294901760
    %360 = vmatpush1.msra.mxu0 %v359
    %v361 = vand.u32 %v117, 4294901760
    %v362 = vsub.f32 %v117, %v361
    %v363 = vand.u32 %v362, 4294901760
    %v364 = vsub.f32 %v362, %v363
    %v365 = vand.u32 %v364, 4294901760
    %366 = vmatprep.subr.mxu0 %v365
    %v367 = vand.u32 %v116, 4294901760
    %v368 = vsub.f32 %v116, %v367
    %v369 = vand.u32 %v368, 4294901760
    %v370 = vsub.f32 %v368, %v369
    %v371 = vand.u32 %v370, 4294901760
    %372 = vmatpush1.msra.mxu0 %v371
    %v373 = vand.u32 %v119, 4294901760
    %v374 = vsub.f32 %v119, %v373
    %v375 = vand.u32 %v374, 4294901760
    %v376 = vsub.f32 %v374, %v375
    %v377 = vand.u32 %v376, 4294901760
    %378 = vmatprep.subr.mxu0 %v377
    %v379 = vand.u32 %v118, 4294901760
    %v380 = vsub.f32 %v118, %v379
    %v381 = vand.u32 %v380, 4294901760
    %v382 = vsub.f32 %v380, %v381
    %v383 = vand.u32 %v382, 4294901760
    %384 = vmatpush1.msra.mxu0 %v383
    %v385 = vand.u32 %v121, 4294901760
    %v386 = vsub.f32 %v121, %v385
    %v387 = vand.u32 %v386, 4294901760
    %v388 = vsub.f32 %v386, %v387
    %v389 = vand.u32 %v388, 4294901760
    %390 = vmatprep.subr.mxu0 %v389
    %v391 = vand.u32 %v120, 4294901760
    %v392 = vsub.f32 %v120, %v391
    %v393 = vand.u32 %v392, 4294901760
    %v394 = vsub.f32 %v392, %v393
    %v395 = vand.u32 %v394, 4294901760
    %396 = vmatpush1.msra.mxu0 %v395
    %v397 = vand.u32 %v123, 4294901760
    %v398 = vsub.f32 %v123, %v397
    %v399 = vand.u32 %v398, 4294901760
    %v400 = vsub.f32 %v398, %v399
    %v401 = vand.u32 %v400, 4294901760
    %402 = vmatprep.subr.mxu0 %v401
    %v403 = vand.u32 %v122, 4294901760
    %v404 = vsub.f32 %v122, %v403
    %v405 = vand.u32 %v404, 4294901760
    %v406 = vsub.f32 %v404, %v405
    %v407 = vand.u32 %v406, 4294901760
    %408 = vmatpush1.msra.mxu0 %v407
    %v409 = vand.u32 %v125, 4294901760
    %v410 = vsub.f32 %v125, %v409
    %v411 = vand.u32 %v410, 4294901760
    %v412 = vsub.f32 %v410, %v411
    %v413 = vand.u32 %v412, 4294901760
    %414 = vmatprep.subr.mxu0 %v413
    %v415 = vand.u32 %v124, 4294901760
    %v416 = vsub.f32 %v124, %v415
    %v417 = vand.u32 %v416, 4294901760
    %v418 = vsub.f32 %v416, %v417
    %v419 = vand.u32 %v418, 4294901760
    %420 = vmatpush1.msra.mxu0 %v419
    %v421 = vand.u32 %v127, 4294901760
    %v422 = vsub.f32 %v127, %v421
    %v423 = vand.u32 %v422, 4294901760
    %v424 = vsub.f32 %v422, %v423
    %v425 = vand.u32 %v424, 4294901760
    %426 = vmatprep.subr.mxu0 %v425
    %v427 = vand.u32 %v126, 4294901760
    %v428 = vsub.f32 %v126, %v427
    %v429 = vand.u32 %v428, 4294901760
    %v430 = vsub.f32 %v428, %v429
    %v431 = vand.u32 %v430, 4294901760
    %432 = vmatpush1.msra.mxu0 %v431
    %v433 = vand.u32 %v129, 4294901760
    %v434 = vsub.f32 %v129, %v433
    %v435 = vand.u32 %v434, 4294901760
    %v436 = vsub.f32 %v434, %v435
    %v437 = vand.u32 %v436, 4294901760
    %438 = vmatprep.subr.mxu0 %v437
    %v439 = vand.u32 %v128, 4294901760
    %v440 = vsub.f32 %v128, %v439
    %v441 = vand.u32 %v440, 4294901760
    %v442 = vsub.f32 %v440, %v441
    %v443 = vand.u32 %v442, 4294901760
    %444 = vmatpush1.msra.mxu0 %v443
    %v445 = vand.u32 %v131, 4294901760
    %v446 = vsub.f32 %v131, %v445
    %v447 = vand.u32 %v446, 4294901760
    %v448 = vsub.f32 %v446, %v447
    %v449 = vand.u32 %v448, 4294901760
    %450 = vmatprep.subr.mxu0 %v449
    %v451 = vand.u32 %v130, 4294901760
    %v452 = vsub.f32 %v130, %v451
    %v453 = vand.u32 %v452, 4294901760
    %v454 = vsub.f32 %v452, %v453
    %v455 = vand.u32 %v454, 4294901760
    %456 = vmatpush1.msra.mxu0 %v455
    %v457 = vand.u32 %v133, 4294901760
    %v458 = vsub.f32 %v133, %v457
    %v459 = vand.u32 %v458, 4294901760
    %v460 = vsub.f32 %v458, %v459
    %v461 = vand.u32 %v460, 4294901760
    %462 = vmatprep.subr.mxu0 %v461
    %v463 = vand.u32 %v132, 4294901760
    %v464 = vsub.f32 %v132, %v463
    %v465 = vand.u32 %v464, 4294901760
    %v466 = vsub.f32 %v464, %v465
    %v467 = vand.u32 %v466, 4294901760
    %468 = vmatpush1.msra.mxu0 %v467
    %v469 = vand.u32 %v135, 4294901760
    %v470 = vsub.f32 %v135, %v469
    %v471 = vand.u32 %v470, 4294901760
    %v472 = vsub.f32 %v470, %v471
    %v473 = vand.u32 %v472, 4294901760
    %474 = vmatprep.subr.mxu0 %v473
    %v475 = vand.u32 %v134, 4294901760
    %v476 = vsub.f32 %v134, %v475
    %v477 = vand.u32 %v476, 4294901760
    %v478 = vsub.f32 %v476, %v477
    %v479 = vand.u32 %v478, 4294901760
    %480 = vmatpush1.msra.mxu0 %v479
    %v481 = vand.u32 %v137, 4294901760
    %v482 = vsub.f32 %v137, %v481
    %v483 = vand.u32 %v482, 4294901760
    %v484 = vsub.f32 %v482, %v483
    %v485 = vand.u32 %v484, 4294901760
    %486 = vmatprep.subr.mxu0 %v485
    %v487 = vand.u32 %v136, 4294901760
    %v488 = vsub.f32 %v136, %v487
    %v489 = vand.u32 %v488, 4294901760
    %v490 = vsub.f32 %v488, %v489
    %v491 = vand.u32 %v490, 4294901760
    %492 = vmatpush1.msra.mxu0 %v491
    %v493 = vand.u32 %v139, 4294901760
    %v494 = vsub.f32 %v139, %v493
    %v495 = vand.u32 %v494, 4294901760
    %v496 = vsub.f32 %v494, %v495
    %v497 = vand.u32 %v496, 4294901760
    %498 = vmatprep.subr.mxu0 %v497
    %v499 = vand.u32 %v138, 4294901760
    %v500 = vsub.f32 %v138, %v499
    %v501 = vand.u32 %v500, 4294901760
    %v502 = vsub.f32 %v500, %v501
    %v503 = vand.u32 %v502, 4294901760
    %504 = vmatpush1.msra.mxu0 %v503
    %505 = vmatprep.subr.mxu0 0.0
    %506 = vmatpush1.msra.mxu0 0.0
    %507 = vmatprep.subr.mxu0 0.0
    %508 = vmatpush1.msra.mxu0 0.0
    %509 = vmatprep.subr.mxu0 0.0
    %510 = vmatpush1.msra.mxu0 0.0
    %511 = vmatprep.subr.mxu0 0.0
    %512 = vmatpush1.msra.mxu0 0.0
    %513 = vmatprep.subr.mxu0 0.0
    %514 = vmatpush1.msra.mxu0 0.0
    %515 = vmatprep.subr.mxu0 0.0
    %516 = vmatpush1.msra.mxu0 0.0
    %517 = vmatprep.subr.mxu0 0.0
    %518 = vmatpush1.msra.mxu0 0.0
    %519 = vmatprep.subr.mxu0 0.0
    %520 = vmatpush1.msra.mxu0 0.0
    %521 = vmatprep.subr.mxu0 0.0
    %522 = vmatpush1.msra.mxu0 0.0
    %523 = vmatprep.subr.mxu0 0.0
    %524 = vmatpush1.msra.mxu0 0.0
    %525 = vmatprep.subr.mxu0 0.0
    %526 = vmatpush1.msra.mxu0 0.0
    %527 = vmatprep.subr.mxu0 0.0
    %528 = vmatpush1.msra.mxu0 0.0
    %v529 = vand.u32 %v142, 4294901760
    %530 = vmatprep.mubr.f32.mxu0 %v529
    %v531 = vand.u32 %v98, 4294901760
    %532 = vmatmul.mubr.f32.gmra.mrb[0].mxu0 %v531
    %v533 = vpop.f32.mrb[0].mxu0
    %v534 = vadd.f32 %v261, %v533
    %v535 = vpop.f32.mrb[0].mxu0
    %v536 = vadd.f32 %v263, %v535
    %537 = vdwg.mxu0
    %v538 = vand.u32 %v101, 4294901760
    %v539 = vsub.f32 %v101, %v538
    %540 = vmatprep.subr.mxu0 %v539
    %v541 = vand.u32 %v100, 4294901760
    %v542 = vsub.f32 %v100, %v541
    %543 = vmatpush1.msra.mxu0 %v542
    %v544 = vand.u32 %v103, 4294901760
    %v545 = vsub.f32 %v103, %v544
    %546 = vmatprep.subr.mxu0 %v545
    %v547 = vand.u32 %v102, 4294901760
    %v548 = vsub.f32 %v102, %v547
    %549 = vmatpush1.msra.mxu0 %v548
    %v550 = vand.u32 %v105, 4294901760
    %v551 = vsub.f32 %v105, %v550
    %552 = vmatprep.subr.mxu0 %v551
    %v553 = vand.u32 %v104, 4294901760
    %v554 = vsub.f32 %v104, %v553
    %555 = vmatpush1.msra.mxu0 %v554
    %v556 = vand.u32 %v107, 4294901760
    %v557 = vsub.f32 %v107, %v556
    %558 = vmatprep.subr.mxu0 %v557
    %v559 = vand.u32 %v106, 4294901760
    %v560 = vsub.f32 %v106, %v559
    %561 = vmatpush1.msra.mxu0 %v560
    %v562 = vand.u32 %v109, 4294901760
    %v563 = vsub.f32 %v109, %v562
    %564 = vmatprep.subr.mxu0 %v563
    %v565 = vand.u32 %v108, 4294901760
    %v566 = vsub.f32 %v108, %v565
    %567 = vmatpush1.msra.mxu0 %v566
    %v568 = vand.u32 %v111, 4294901760
    %v569 = vsub.f32 %v111, %v568
    %570 = vmatprep.subr.mxu0 %v569
    %v571 = vand.u32 %v110, 4294901760
    %v572 = vsub.f32 %v110, %v571
    %573 = vmatpush1.msra.mxu0 %v572
    %v574 = vand.u32 %v113, 4294901760
    %v575 = vsub.f32 %v113, %v574
    %576 = vmatprep.subr.mxu0 %v575
    %v577 = vand.u32 %v112, 4294901760
    %v578 = vsub.f32 %v112, %v577
    %579 = vmatpush1.msra.mxu0 %v578
    %v580 = vand.u32 %v115, 4294901760
    %v581 = vsub.f32 %v115, %v580
    %582 = vmatprep.subr.mxu0 %v581
    %v583 = vand.u32 %v114, 4294901760
    %v584 = vsub.f32 %v114, %v583
    %585 = vmatpush1.msra.mxu0 %v584
    %v586 = vand.u32 %v117, 4294901760
    %v587 = vsub.f32 %v117, %v586
    %588 = vmatprep.subr.mxu0 %v587
    %v589 = vand.u32 %v116, 4294901760
    %v590 = vsub.f32 %v116, %v589
    %591 = vmatpush1.msra.mxu0 %v590
    %v592 = vand.u32 %v119, 4294901760
    %v593 = vsub.f32 %v119, %v592
    %594 = vmatprep.subr.mxu0 %v593
    %v595 = vand.u32 %v118, 4294901760
    %v596 = vsub.f32 %v118, %v595
    %597 = vmatpush1.msra.mxu0 %v596
    %v598 = vand.u32 %v121, 4294901760
    %v599 = vsub.f32 %v121, %v598
    %600 = vmatprep.subr.mxu0 %v599
    %v601 = vand.u32 %v120, 4294901760
    %v602 = vsub.f32 %v120, %v601
    %603 = vmatpush1.msra.mxu0 %v602
    %v604 = vand.u32 %v123, 4294901760
    %v605 = vsub.f32 %v123, %v604
    %606 = vmatprep.subr.mxu0 %v605
    %v607 = vand.u32 %v122, 4294901760
    %v608 = vsub.f32 %v122, %v607
    %609 = vmatpush1.msra.mxu0 %v608
    %v610 = vand.u32 %v125, 4294901760
    %v611 = vsub.f32 %v125, %v610
    %612 = vmatprep.subr.mxu0 %v611
    %v613 = vand.u32 %v124, 4294901760
    %v614 = vsub.f32 %v124, %v613
    %615 = vmatpush1.msra.mxu0 %v614
    %v616 = vand.u32 %v127, 4294901760
    %v617 = vsub.f32 %v127, %v616
    %618 = vmatprep.subr.mxu0 %v617
    %v619 = vand.u32 %v126, 4294901760
    %v620 = vsub.f32 %v126, %v619
    %621 = vmatpush1.msra.mxu0 %v620
    %v622 = vand.u32 %v129, 4294901760
    %v623 = vsub.f32 %v129, %v622
    %624 = vmatprep.subr.mxu0 %v623
    %v625 = vand.u32 %v128, 4294901760
    %v626 = vsub.f32 %v128, %v625
    %627 = vmatpush1.msra.mxu0 %v626
    %v628 = vand.u32 %v131, 4294901760
    %v629 = vsub.f32 %v131, %v628
    %630 = vmatprep.subr.mxu0 %v629
    %v631 = vand.u32 %v130, 4294901760
    %v632 = vsub.f32 %v130, %v631
    %633 = vmatpush1.msra.mxu0 %v632
    %v634 = vand.u32 %v133, 4294901760
    %v635 = vsub.f32 %v133, %v634
    %636 = vmatprep.subr.mxu0 %v635
    %v637 = vand.u32 %v132, 4294901760
    %v638 = vsub.f32 %v132, %v637
    %639 = vmatpush1.msra.mxu0 %v638
    %v640 = vand.u32 %v135, 4294901760
    %v641 = vsub.f32 %v135, %v640
    %642 = vmatprep.subr.mxu0 %v641
    %v643 = vand.u32 %v134, 4294901760
    %v644 = vsub.f32 %v134, %v643
    %645 = vmatpush1.msra.mxu0 %v644
    %v646 = vand.u32 %v137, 4294901760
    %v647 = vsub.f32 %v137, %v646
    %648 = vmatprep.subr.mxu0 %v647
    %v649 = vand.u32 %v136, 4294901760
    %v650 = vsub.f32 %v136, %v649
    %651 = vmatpush1.msra.mxu0 %v650
    %v652 = vand.u32 %v139, 4294901760
    %v653 = vsub.f32 %v139, %v652
    %654 = vmatprep.subr.mxu0 %v653
    %v655 = vand.u32 %v138, 4294901760
    %v656 = vsub.f32 %v138, %v655
    %657 = vmatpush1.msra.mxu0 %v656
    %658 = vmatprep.subr.mxu0 0.0
    %659 = vmatpush1.msra.mxu0 0.0
    %660 = vmatprep.subr.mxu0 0.0
    %661 = vmatpush1.msra.mxu0 0.0
    %662 = vmatprep.subr.mxu0 0.0
    %663 = vmatpush1.msra.mxu0 0.0
    %664 = vmatprep.subr.mxu0 0.0
    %665 = vmatpush1.msra.mxu0 0.0
    %666 = vmatprep.subr.mxu0 0.0
    %667 = vmatpush1.msra.mxu0 0.0
    %668 = vmatprep.subr.mxu0 0.0
    %669 = vmatpush1.msra.mxu0 0.0
    %670 = vmatprep.subr.mxu0 0.0
    %671 = vmatpush1.msra.mxu0 0.0
    %672 = vmatprep.subr.mxu0 0.0
    %673 = vmatpush1.msra.mxu0 0.0
    %674 = vmatprep.subr.mxu0 0.0
    %675 = vmatpush1.msra.mxu0 0.0
    %676 = vmatprep.subr.mxu0 0.0
    %677 = vmatpush1.msra.mxu0 0.0
    %678 = vmatprep.subr.mxu0 0.0
    %679 = vmatpush1.msra.mxu0 0.0
    %680 = vmatprep.subr.mxu0 0.0
    %681 = vmatpush1.msra.mxu0 0.0
    %v682 = vand.u32 %v142, 4294901760
    %v683 = vsub.f32 %v142, %v682
    %684 = vmatprep.mubr.f32.mxu0 %v683
    %v685 = vand.u32 %v98, 4294901760
    %v686 = vsub.f32 %v98, %v685
    %687 = vmatmul.mubr.f32.gmra.mrb[0].mxu0 %v686
    %v688 = vpop.f32.mrb[0].mxu0
    %v689 = vadd.f32 %v534, %v688
    %v690 = vpop.f32.mrb[0].mxu0
    %v691 = vadd.f32 %v536, %v690
    %692 = vdwg.mxu0
    %v693 = vand.u32 %v101, 4294901760
    %694 = vmatprep.subr.mxu0 %v693
    %v695 = vand.u32 %v100, 4294901760
    %696 = vmatpush1.msra.mxu0 %v695
    %v697 = vand.u32 %v103, 4294901760
    %698 = vmatprep.subr.mxu0 %v697
    %v699 = vand.u32 %v102, 4294901760
    %700 = vmatpush1.msra.mxu0 %v699
    %v701 = vand.u32 %v105, 4294901760
    %702 = vmatprep.subr.mxu0 %v701
    %v703 = vand.u32 %v104, 4294901760
    %704 = vmatpush1.msra.mxu0 %v703
    %v705 = vand.u32 %v107, 4294901760
    %706 = vmatprep.subr.mxu0 %v705
    %v707 = vand.u32 %v106, 4294901760
    %708 = vmatpush1.msra.mxu0 %v707
    %v709 = vand.u32 %v109, 4294901760
    %710 = vmatprep.subr.mxu0 %v709
    %v711 = vand.u32 %v108, 4294901760
    %712 = vmatpush1.msra.mxu0 %v711
    %v713 = vand.u32 %v111, 4294901760
    %714 = vmatprep.subr.mxu0 %v713
    %v715 = vand.u32 %v110, 4294901760
    %716 = vmatpush1.msra.mxu0 %v715
    %v717 = vand.u32 %v113, 4294901760
    %718 = vmatprep.subr.mxu0 %v717
    %v719 = vand.u32 %v112, 4294901760
    %720 = vmatpush1.msra.mxu0 %v719
    %v721 = vand.u32 %v115, 4294901760
    %722 = vmatprep.subr.mxu0 %v721
    %v723 = vand.u32 %v114, 4294901760
    %724 = vmatpush1.msra.mxu0 %v723
    %v725 = vand.u32 %v117, 4294901760
    %726 = vmatprep.subr.mxu0 %v725
    %v727 = vand.u32 %v116, 4294901760
    %728 = vmatpush1.msra.mxu0 %v727
    %v729 = vand.u32 %v119, 4294901760
    %730 = vmatprep.subr.mxu0 %v729
    %v731 = vand.u32 %v118, 4294901760
    %732 = vmatpush1.msra.mxu0 %v731
    %v733 = vand.u32 %v121, 4294901760
    %734 = vmatprep.subr.mxu0 %v733
    %v735 = vand.u32 %v120, 4294901760
    %736 = vmatpush1.msra.mxu0 %v735
    %v737 = vand.u32 %v123, 4294901760
    %738 = vmatprep.subr.mxu0 %v737
    %v739 = vand.u32 %v122, 4294901760
    %740 = vmatpush1.msra.mxu0 %v739
    %v741 = vand.u32 %v125, 4294901760
    %742 = vmatprep.subr.mxu0 %v741
    %v743 = vand.u32 %v124, 4294901760
    %744 = vmatpush1.msra.mxu0 %v743
    %v745 = vand.u32 %v127, 4294901760
    %746 = vmatprep.subr.mxu0 %v745
    %v747 = vand.u32 %v126, 4294901760
    %748 = vmatpush1.msra.mxu0 %v747
    %v749 = vand.u32 %v129, 4294901760
    %750 = vmatprep.subr.mxu0 %v749
    %v751 = vand.u32 %v128, 4294901760
    %752 = vmatpush1.msra.mxu0 %v751
    %v753 = vand.u32 %v131, 4294901760
    %754 = vmatprep.subr.mxu0 %v753
    %v755 = vand.u32 %v130, 4294901760
    %756 = vmatpush1.msra.mxu0 %v755
    %v757 = vand.u32 %v133, 4294901760
    %758 = vmatprep.subr.mxu0 %v757
    %v759 = vand.u32 %v132, 4294901760
    %760 = vmatpush1.msra.mxu0 %v759
    %v761 = vand.u32 %v135, 4294901760
    %762 = vmatprep.subr.mxu0 %v761
    %v763 = vand.u32 %v134, 4294901760
    %764 = vmatpush1.msra.mxu0 %v763
    %v765 = vand.u32 %v137, 4294901760
    %766 = vmatprep.subr.mxu0 %v765
    %v767 = vand.u32 %v136, 4294901760
    %768 = vmatpush1.msra.mxu0 %v767
    %v769 = vand.u32 %v139, 4294901760
    %770 = vmatprep.subr.mxu0 %v769
    %v771 = vand.u32 %v138, 4294901760
    %772 = vmatpush1.msra.mxu0 %v771
    %773 = vmatprep.subr.mxu0 0.0
    %774 = vmatpush1.msra.mxu0 0.0
    %775 = vmatprep.subr.mxu0 0.0
    %776 = vmatpush1.msra.mxu0 0.0
    %777 = vmatprep.subr.mxu0 0.0
    %778 = vmatpush1.msra.mxu0 0.0
    %779 = vmatprep.subr.mxu0 0.0
    %780 = vmatpush1.msra.mxu0 0.0
    %781 = vmatprep.subr.mxu0 0.0
    %782 = vmatpush1.msra.mxu0 0.0
    %783 = vmatprep.subr.mxu0 0.0
    %784 = vmatpush1.msra.mxu0 0.0
    %785 = vmatprep.subr.mxu0 0.0
    %786 = vmatpush1.msra.mxu0 0.0
    %787 = vmatprep.subr.mxu0 0.0
    %788 = vmatpush1.msra.mxu0 0.0
    %789 = vmatprep.subr.mxu0 0.0
    %790 = vmatpush1.msra.mxu0 0.0
    %791 = vmatprep.subr.mxu0 0.0
    %792 = vmatpush1.msra.mxu0 0.0
    %793 = vmatprep.subr.mxu0 0.0
    %794 = vmatpush1.msra.mxu0 0.0
    %795 = vmatprep.subr.mxu0 0.0
    %796 = vmatpush1.msra.mxu0 0.0
    %v797 = vand.u32 %v142, 4294901760
    %v798 = vsub.f32 %v142, %v797
    %v799 = vand.u32 %v798, 4294901760
    %800 = vmatprep.mubr.f32.mxu0 %v799
    %v801 = vand.u32 %v98, 4294901760
    %v802 = vsub.f32 %v98, %v801
    %v803 = vand.u32 %v802, 4294901760
    %804 = vmatmul.mubr.f32.gmra.mrb[0].mxu0 %v803
    %v805 = vpop.f32.mrb[0].mxu0
    %v806 = vadd.f32 %v689, %v805
    %v807 = vpop.f32.mrb[0].mxu0
    %v808 = vadd.f32 %v691, %v807
    %809 = vdwg.mxu0
    %v810 = vand.u32 %v101, 4294901760
    %v811 = vsub.f32 %v101, %v810
    %v812 = vand.u32 %v811, 4294901760
    %813 = vmatprep.subr.mxu0 %v812
    %v814 = vand.u32 %v100, 4294901760
    %v815 = vsub.f32 %v100, %v814
    %v816 = vand.u32 %v815, 4294901760
    %817 = vmatpush1.msra.mxu0 %v816
    %v818 = vand.u32 %v103, 4294901760
    %v819 = vsub.f32 %v103, %v818
    %v820 = vand.u32 %v819, 4294901760
    %821 = vmatprep.subr.mxu0 %v820
    %v822 = vand.u32 %v102, 4294901760
    %v823 = vsub.f32 %v102, %v822
    %v824 = vand.u32 %v823, 4294901760
    %825 = vmatpush1.msra.mxu0 %v824
    %v826 = vand.u32 %v105, 4294901760
    %v827 = vsub.f32 %v105, %v826
    %v828 = vand.u32 %v827, 4294901760
    %829 = vmatprep.subr.mxu0 %v828
    %v830 = vand.u32 %v104, 4294901760
    %v831 = vsub.f32 %v104, %v830
    %v832 = vand.u32 %v831, 4294901760
    %833 = vmatpush1.msra.mxu0 %v832
    %v834 = vand.u32 %v107, 4294901760
    %v835 = vsub.f32 %v107, %v834
    %v836 = vand.u32 %v835, 4294901760
    %837 = vmatprep.subr.mxu0 %v836
    %v838 = vand.u32 %v106, 4294901760
    %v839 = vsub.f32 %v106, %v838
    %v840 = vand.u32 %v839, 4294901760
    %841 = vmatpush1.msra.mxu0 %v840
    %v842 = vand.u32 %v109, 4294901760
    %v843 = vsub.f32 %v109, %v842
    %v844 = vand.u32 %v843, 4294901760
    %845 = vmatprep.subr.mxu0 %v844
    %v846 = vand.u32 %v108, 4294901760
    %v847 = vsub.f32 %v108, %v846
    %v848 = vand.u32 %v847, 4294901760
    %849 = vmatpush1.msra.mxu0 %v848
    %v850 = vand.u32 %v111, 4294901760
    %v851 = vsub.f32 %v111, %v850
    %v852 = vand.u32 %v851, 4294901760
    %853 = vmatprep.subr.mxu0 %v852
    %v854 = vand.u32 %v110, 4294901760
    %v855 = vsub.f32 %v110, %v854
    %v856 = vand.u32 %v855, 4294901760
    %857 = vmatpush1.msra.mxu0 %v856
    %v858 = vand.u32 %v113, 4294901760
    %v859 = vsub.f32 %v113, %v858
    %v860 = vand.u32 %v859, 4294901760
    %861 = vmatprep.subr.mxu0 %v860
    %v862 = vand.u32 %v112, 4294901760
    %v863 = vsub.f32 %v112, %v862
    %v864 = vand.u32 %v863, 4294901760
    %865 = vmatpush1.msra.mxu0 %v864
    %v866 = vand.u32 %v115, 4294901760
    %v867 = vsub.f32 %v115, %v866
    %v868 = vand.u32 %v867, 4294901760
    %869 = vmatprep.subr.mxu0 %v868
    %v870 = vand.u32 %v114, 4294901760
    %v871 = vsub.f32 %v114, %v870
    %v872 = vand.u32 %v871, 4294901760
    %873 = vmatpush1.msra.mxu0 %v872
    %v874 = vand.u32 %v117, 4294901760
    %v875 = vsub.f32 %v117, %v874
    %v876 = vand.u32 %v875, 4294901760
    %877 = vmatprep.subr.mxu0 %v876
    %v878 = vand.u32 %v116, 4294901760
    %v879 = vsub.f32 %v116, %v878
    %v880 = vand.u32 %v879, 4294901760
    %881 = vmatpush1.msra.mxu0 %v880
    %v882 = vand.u32 %v119, 4294901760
    %v883 = vsub.f32 %v119, %v882
    %v884 = vand.u32 %v883, 4294901760
    %885 = vmatprep.subr.mxu0 %v884
    %v886 = vand.u32 %v118, 4294901760
    %v887 = vsub.f32 %v118, %v886
    %v888 = vand.u32 %v887, 4294901760
    %889 = vmatpush1.msra.mxu0 %v888
    %v890 = vand.u32 %v121, 4294901760
    %v891 = vsub.f32 %v121, %v890
    %v892 = vand.u32 %v891, 4294901760
    %893 = vmatprep.subr.mxu0 %v892
    %v894 = vand.u32 %v120, 4294901760
    %v895 = vsub.f32 %v120, %v894
    %v896 = vand.u32 %v895, 4294901760
    %897 = vmatpush1.msra.mxu0 %v896
    %v898 = vand.u32 %v123, 4294901760
    %v899 = vsub.f32 %v123, %v898
    %v900 = vand.u32 %v899, 4294901760
    %901 = vmatprep.subr.mxu0 %v900
    %v902 = vand.u32 %v122, 4294901760
    %v903 = vsub.f32 %v122, %v902
    %v904 = vand.u32 %v903, 4294901760
    %905 = vmatpush1.msra.mxu0 %v904
    %v906 = vand.u32 %v125, 4294901760
    %v907 = vsub.f32 %v125, %v906
    %v908 = vand.u32 %v907, 4294901760
    %909 = vmatprep.subr.mxu0 %v908
    %v910 = vand.u32 %v124, 4294901760
    %v911 = vsub.f32 %v124, %v910
    %v912 = vand.u32 %v911, 4294901760
    %913 = vmatpush1.msra.mxu0 %v912
    %v914 = vand.u32 %v127, 4294901760
    %v915 = vsub.f32 %v127, %v914
    %v916 = vand.u32 %v915, 4294901760
    %917 = vmatprep.subr.mxu0 %v916
    %v918 = vand.u32 %v126, 4294901760
    %v919 = vsub.f32 %v126, %v918
    %v920 = vand.u32 %v919, 4294901760
    %921 = vmatpush1.msra.mxu0 %v920
    %v922 = vand.u32 %v129, 4294901760
    %v923 = vsub.f32 %v129, %v922
    %v924 = vand.u32 %v923, 4294901760
    %925 = vmatprep.subr.mxu0 %v924
    %v926 = vand.u32 %v128, 4294901760
    %v927 = vsub.f32 %v128, %v926
    %v928 = vand.u32 %v927, 4294901760
    %929 = vmatpush1.msra.mxu0 %v928
    %v930 = vand.u32 %v131, 4294901760
    %v931 = vsub.f32 %v131, %v930
    %v932 = vand.u32 %v931, 4294901760
    %933 = vmatprep.subr.mxu0 %v932
    %v934 = vand.u32 %v130, 4294901760
    %v935 = vsub.f32 %v130, %v934
    %v936 = vand.u32 %v935, 4294901760
    %937 = vmatpush1.msra.mxu0 %v936
    %v938 = vand.u32 %v133, 4294901760
    %v939 = vsub.f32 %v133, %v938
    %v940 = vand.u32 %v939, 4294901760
    %941 = vmatprep.subr.mxu0 %v940
    %v942 = vand.u32 %v132, 4294901760
    %v943 = vsub.f32 %v132, %v942
    %v944 = vand.u32 %v943, 4294901760
    %945 = vmatpush1.msra.mxu0 %v944
    %v946 = vand.u32 %v135, 4294901760
    %v947 = vsub.f32 %v135, %v946
    %v948 = vand.u32 %v947, 4294901760
    %949 = vmatprep.subr.mxu0 %v948
    %v950 = vand.u32 %v134, 4294901760
    %v951 = vsub.f32 %v134, %v950
    %v952 = vand.u32 %v951, 4294901760
    %953 = vmatpush1.msra.mxu0 %v952
    %v954 = vand.u32 %v137, 4294901760
    %v955 = vsub.f32 %v137, %v954
    %v956 = vand.u32 %v955, 4294901760
    %957 = vmatprep.subr.mxu0 %v956
    %v958 = vand.u32 %v136, 4294901760
    %v959 = vsub.f32 %v136, %v958
    %v960 = vand.u32 %v959, 4294901760
    %961 = vmatpush1.msra.mxu0 %v960
    %v962 = vand.u32 %v139, 4294901760
    %v963 = vsub.f32 %v139, %v962
    %v964 = vand.u32 %v963, 4294901760
    %965 = vmatprep.subr.mxu0 %v964
    %v966 = vand.u32 %v138, 4294901760
    %v967 = vsub.f32 %v138, %v966
    %v968 = vand.u32 %v967, 4294901760
    %969 = vmatpush1.msra.mxu0 %v968
    %970 = vmatprep.subr.mxu0 0.0
    %971 = vmatpush1.msra.mxu0 0.0
    %972 = vmatprep.subr.mxu0 0.0
    %973 = vmatpush1.msra.mxu0 0.0
    %974 = vmatprep.subr.mxu0 0.0
    %975 = vmatpush1.msra.mxu0 0.0
    %976 = vmatprep.subr.mxu0 0.0
    %977 = vmatpush1.msra.mxu0 0.0
    %978 = vmatprep.subr.mxu0 0.0
    %979 = vmatpush1.msra.mxu0 0.0
    %980 = vmatprep.subr.mxu0 0.0
    %981 = vmatpush1.msra.mxu0 0.0
    %982 = vmatprep.subr.mxu0 0.0
    %983 = vmatpush1.msra.mxu0 0.0
    %984 = vmatprep.subr.mxu0 0.0
    %985 = vmatpush1.msra.mxu0 0.0
    %986 = vmatprep.subr.mxu0 0.0
    %987 = vmatpush1.msra.mxu0 0.0
    %988 = vmatprep.subr.mxu0 0.0
    %989 = vmatpush1.msra.mxu0 0.0
    %990 = vmatprep.subr.mxu0 0.0
    %991 = vmatpush1.msra.mxu0 0.0
    %992 = vmatprep.subr.mxu0 0.0
    %993 = vmatpush1.msra.mxu0 0.0
    %v994 = vand.u32 %v142, 4294901760
    %995 = vmatprep.mubr.f32.mxu0 %v994
    %v996 = vand.u32 %v98, 4294901760
    %997 = vmatmul.mubr.f32.gmra.mrb[0].mxu0 %v996
    %v998 = vpop.f32.mrb[0].mxu0
    %v999 = vadd.f32 %v806, %v998
    %v1000 = vpop.f32.mrb[0].mxu0
    %v1001 = vadd.f32 %v808, %v1000
    %1002 = vdwg.mxu0
    %v1003 = vand.u32 %v101, 4294901760
    %1004 = vmatprep.subr.mxu0 %v1003
    %v1005 = vand.u32 %v100, 4294901760
    %1006 = vmatpush1.msra.mxu0 %v1005
    %v1007 = vand.u32 %v103, 4294901760
    %1008 = vmatprep.subr.mxu0 %v1007
    %v1009 = vand.u32 %v102, 4294901760
    %1010 = vmatpush1.msra.mxu0 %v1009
    %v1011 = vand.u32 %v105, 4294901760
    %1012 = vmatprep.subr.mxu0 %v1011
    %v1013 = vand.u32 %v104, 4294901760
    %1014 = vmatpush1.msra.mxu0 %v1013
    %v1015 = vand.u32 %v107, 4294901760
    %1016 = vmatprep.subr.mxu0 %v1015
    %v1017 = vand.u32 %v106, 4294901760
    %1018 = vmatpush1.msra.mxu0 %v1017
    %v1019 = vand.u32 %v109, 4294901760
    %1020 = vmatprep.subr.mxu0 %v1019
    %v1021 = vand.u32 %v108, 4294901760
    %1022 = vmatpush1.msra.mxu0 %v1021
    %v1023 = vand.u32 %v111, 4294901760
    %1024 = vmatprep.subr.mxu0 %v1023
    %v1025 = vand.u32 %v110, 4294901760
    %1026 = vmatpush1.msra.mxu0 %v1025
    %v1027 = vand.u32 %v113, 4294901760
    %1028 = vmatprep.subr.mxu0 %v1027
    %v1029 = vand.u32 %v112, 4294901760
    %1030 = vmatpush1.msra.mxu0 %v1029
    %v1031 = vand.u32 %v115, 4294901760
    %1032 = vmatprep.subr.mxu0 %v1031
    %v1033 = vand.u32 %v114, 4294901760
    %1034 = vmatpush1.msra.mxu0 %v1033
    %v1035 = vand.u32 %v117, 4294901760
    %1036 = vmatprep.subr.mxu0 %v1035
    %v1037 = vand.u32 %v116, 4294901760
    %1038 = vmatpush1.msra.mxu0 %v1037
    %v1039 = vand.u32 %v119, 4294901760
    %1040 = vmatprep.subr.mxu0 %v1039
    %v1041 = vand.u32 %v118, 4294901760
    %1042 = vmatpush1.msra.mxu0 %v1041
    %v1043 = vand.u32 %v121, 4294901760
    %1044 = vmatprep.subr.mxu0 %v1043
    %v1045 = vand.u32 %v120, 4294901760
    %1046 = vmatpush1.msra.mxu0 %v1045
    %v1047 = vand.u32 %v123, 4294901760
    %1048 = vmatprep.subr.mxu0 %v1047
    %v1049 = vand.u32 %v122, 4294901760
    %1050 = vmatpush1.msra.mxu0 %v1049
    %v1051 = vand.u32 %v125, 4294901760
    %1052 = vmatprep.subr.mxu0 %v1051
    %v1053 = vand.u32 %v124, 4294901760
    %1054 = vmatpush1.msra.mxu0 %v1053
    %v1055 = vand.u32 %v127, 4294901760
    %1056 = vmatprep.subr.mxu0 %v1055
    %v1057 = vand.u32 %v126, 4294901760
    %1058 = vmatpush1.msra.mxu0 %v1057
    %v1059 = vand.u32 %v129, 4294901760
    %1060 = vmatprep.subr.mxu0 %v1059
    %v1061 = vand.u32 %v128, 4294901760
    %1062 = vmatpush1.msra.mxu0 %v1061
    %v1063 = vand.u32 %v131, 4294901760
    %1064 = vmatprep.subr.mxu0 %v1063
    %v1065 = vand.u32 %v130, 4294901760
    %1066 = vmatpush1.msra.mxu0 %v1065
    %v1067 = vand.u32 %v133, 4294901760
    %1068 = vmatprep.subr.mxu0 %v1067
    %v1069 = vand.u32 %v132, 4294901760
    %1070 = vmatpush1.msra.mxu0 %v1069
    %v1071 = vand.u32 %v135, 4294901760
    %1072 = vmatprep.subr.mxu0 %v1071
    %v1073 = vand.u32 %v134, 4294901760
    %1074 = vmatpush1.msra.mxu0 %v1073
    %v1075 = vand.u32 %v137, 4294901760
    %1076 = vmatprep.subr.mxu0 %v1075
    %v1077 = vand.u32 %v136, 4294901760
    %1078 = vmatpush1.msra.mxu0 %v1077
    %v1079 = vand.u32 %v139, 4294901760
    %1080 = vmatprep.subr.mxu0 %v1079
    %v1081 = vand.u32 %v138, 4294901760
    %1082 = vmatpush1.msra.mxu0 %v1081
    %1083 = vmatprep.subr.mxu0 0.0
    %1084 = vmatpush1.msra.mxu0 0.0
    %1085 = vmatprep.subr.mxu0 0.0
    %1086 = vmatpush1.msra.mxu0 0.0
    %1087 = vmatprep.subr.mxu0 0.0
    %1088 = vmatpush1.msra.mxu0 0.0
    %1089 = vmatprep.subr.mxu0 0.0
    %1090 = vmatpush1.msra.mxu0 0.0
    %1091 = vmatprep.subr.mxu0 0.0
    %1092 = vmatpush1.msra.mxu0 0.0
    %1093 = vmatprep.subr.mxu0 0.0
    %1094 = vmatpush1.msra.mxu0 0.0
    %1095 = vmatprep.subr.mxu0 0.0
    %1096 = vmatpush1.msra.mxu0 0.0
    %1097 = vmatprep.subr.mxu0 0.0
    %1098 = vmatpush1.msra.mxu0 0.0
    %1099 = vmatprep.subr.mxu0 0.0
    %1100 = vmatpush1.msra.mxu0 0.0
    %1101 = vmatprep.subr.mxu0 0.0
    %1102 = vmatpush1.msra.mxu0 0.0
    %1103 = vmatprep.subr.mxu0 0.0
    %1104 = vmatpush1.msra.mxu0 0.0
    %1105 = vmatprep.subr.mxu0 0.0
    %1106 = vmatpush1.msra.mxu0 0.0
    %v1107 = vand.u32 %v142, 4294901760
    %1108 = vmatprep.mubr.f32.mxu0 %v1107
    %v1109 = vand.u32 %v98, 4294901760
    %1110 = vmatmul.mubr.f32.gmra.mrb[0].mxu0 %v1109
    %v1111 = vpop.f32.mrb[0].mxu0
    %v1112 = vadd.f32 %v999, %v1111
    %v1113 = vpop.f32.mrb[0].mxu0
    %v1114 = vadd.f32 %v1001, %v1113
    %1115 = vdwg.mxu0
    %v1116 = vmul.f32 %v1112, %v1114
    %1117 = vst [vmem:[#allocation7] sm:$0xff] %v1116
    // Predicated region
    $region18: #{tpu_custom_call.1} parent=1 // pred_check
      _
    $region19: #{tpu_custom_call.1} parent=1 // pred_check_branch
      %1119 = sbr.rel (0) target = $region21
    $region20: #{tpu_custom_call.1} parent=1 // pred_region
      %s1121 = ssub.s32 128, 128
      %1122 = vsyncadd [#allocation4], %s1121
      %s1124 = sshll.u32 [#allocation7], 4
      %s1125 = int_to_ptr.vmem [resolvable:$true] %s1124
      %1127 = dma.vmem_to_hbm [thread:$0]  %s1125, 128, %s2, [#allocation4]
    $region21: #{tpu_custom_call.1} parent=1 // pred_fallthru
      _
    // Predicated region
    $region22: #{tpu_custom_call.1} parent=1 // pred_check
      _
    $region23: #{tpu_custom_call.1} parent=1 // pred_check_branch
      %1129 = sbr.rel (0) target = $region25
    $region24: #{tpu_custom_call.1} parent=1 // pred_region
      %1130 = dma.done [#allocation4], 128
    $region25: #{tpu_custom_call.1} parent=1 // pred_fallthru
      _
    %1131 = vsyncpa [#allocation3], 1
    %1132 = vsyncpa [#allocation6], 1
    %1133 = vsyncpa [#allocation4], 1

</llo_original>
